<compile_context>
chip_gen: v5e
topology: v5e:2x2
jax: 0.10.0
libtpu: 0.0.40
codegen_flags: <defaults>
</compile_context>

<pallas_src>
import math

import jax
import jax.numpy as jnp
from jax.experimental import pallas as pl
from jax.experimental.pallas import tpu as pltpu

# ----------------------------- action spec ---------------------------------
ACTION_TYPE = "action_type"
SCALAR = "scalar"
SPATIAL = "spatial"

NEG_INF = -1e30  # f32 bias for padded logit lanes (exp underflows to 0)


def round_up(x, m):
    return ((x + m - 1) // m) * m


def cdiv(a, b):
    return -(-a // b)


def build_head_meta(action_spec):
    """Flatten the action spec into per-head metadata.

    Each entry: (component_index, kind, out_size, xy_size)
      kind in {"full", "div", "mod"}  (SPATIAL splits into div/mod heads).
    """
    heads = []
    for comp, (atype, n) in enumerate(action_spec):
        if atype in (ACTION_TYPE, SCALAR):
            heads.append((comp, "full", n, 0))
        elif atype == SPATIAL:
            # NOTE: assumes n is a perfect square (same as the PyTorch ref).
            xy = int(math.sqrt(n))
            heads.append((comp, "div", xy, xy))
            heads.append((comp, "mod", xy, xy))
        else:
            raise ValueError("Such ActionVectorType is not defined.")
    return heads


def choose_tile_b(B, max_tile_b=256):
    """Pick a batch tile: minimize padding waste, prefer >=2 grid steps."""
    cands = [t for t in (8, 16, 32, 64, 128, 256)
             if t <= max(8, max_tile_b) and (t >= 16 or B <= 8)]

    def cost(t):
        b_pad = round_up(B, t)
        steps = b_pad // t
        waste = b_pad - B                       # padded rows do full work
        single = 1 if (steps < 2 and B > 8) else 0   # v7x: want >=2 steps
        return (single, waste + 4 * steps, -t)  # ~4 rows == one step overhead

    t = min(cands, key=cost)
    return t, round_up(B, t)


# ------------------------------- kernel ------------------------------------
def _make_kernel(head_offsets, head_sizes, tot, slab_w):
    n_heads = len(head_sizes)

    def kernel(obs_ref, w1_ref, b1_ref, wh_ref, bh_ref, idx_ref, msk_ref,
               out_ref):
        # shared trunk (previous_modules): Linear + ReLU, computed once.
        # bf16 MXU matmul, f32 accumulation, f32 bias add.
        feat = jnp.dot(obs_ref[...], w1_ref[...],
                       preferred_element_type=jnp.float32)
        feat = jnp.maximum(feat + b1_ref[...], 0.0)

        # ONE fused matmul for every head's logits, packed into a shared
        # lane stripe of width `tot` (unused lanes get -1e30 via the bias).
        logits = jnp.dot(feat.astype(jnp.bfloat16), wh_ref[...],
                         preferred_element_type=jnp.float32) + bh_ref[...]
        out_ref[:, :tot] = logits                 # lane-dense store

        # Re-read the stored tile: bounds the matmul-result live range so the
        # unrolled head loop below doesn't hold the whole product in vregs.
        lg = out_ref[:, :tot]
        bsz = lg.shape[0]
        lane = jax.lax.broadcasted_iota(jnp.int32, (bsz, tot), 1)

        # Per-head max (static lane ranges), broadcast back to each head's
        # lanes, so exp() runs ONCE over the packed width.
        maxes = []
        max_lane = jnp.full((bsz, tot), NEG_INF, jnp.float32)
        for h in range(n_heads):
            in_seg = (lane >= head_offsets[h]) & \
                     (lane < head_offsets[h] + head_sizes[h])
            m_h = jnp.max(jnp.where(in_seg, lg, NEG_INF),
                          axis=-1, keepdims=True)
            maxes.append(m_h)
            max_lane = jnp.where(in_seg, m_h, max_lane)
        e = jnp.exp(lg - max_lane)                # single EUP pass

        idx_all = idx_ref[...]                    # (bsz, 128) int32 (lane idx)
        msk_all = msk_ref[...]                    # (bsz, 128) f32
        total = jnp.zeros((bsz, 1), jnp.float32)
        for h in range(n_heads):                  # unrolled (n_heads small)
            in_seg = (lane >= head_offsets[h]) & \
                     (lane < head_offsets[h] + head_sizes[h])
            s_h = jnp.sum(jnp.where(in_seg, e, 0.0), axis=-1, keepdims=True)
            lse_h = jnp.log(s_h) + maxes[h]
            sel_h = jnp.sum(jnp.where(lane == idx_all[:, h:h + 1], lg, 0.0),
                            axis=-1, keepdims=True)     # logits[off_h + a_h]
            total = total + (sel_h - lse_h) * msk_all[:, h:h + 1]

        # logp broadcast into the final lane-dense stripe of the slab
        out_ref[:, tot:slab_w] = jnp.broadcast_to(total, (bsz, slab_w - tot))

    return kernel


# ------------------------------- wrapper ------------------------------------
def sc2_actor_forward(obs, act, params, action_spec, action_mask,
                      *, max_tile_b=256):
    """Returns (pis, logp_a): pis is a list of logits arrays (tuple of two for
    SPATIAL components); logp_a has shape (B,)."""
    B, obs_dim = obs.shape
    hidden = params["w1"].shape[1]
    head_meta = build_head_meta(action_spec)
    n_heads = len(head_meta)
    sizes = [s for (_, _, s, _) in head_meta]

    # pack heads into a shared contiguous lane stripe
    offsets, off = [], 0
    for s in sizes:
        offsets.append(off)
        off += s
    tot = round_up(off, 128)
    slab_w = tot + 128                     # +128 lane-dense stripe for logp

    obs_p_dim = round_up(obs_dim, 128)
    hid_p = round_up(hidden, 128)

    tile_b, b_pad = choose_tile_b(B, max_tile_b)

    # ---- pad / fuse parameters (zero padding is exact for Linear+ReLU) ----
    w1 = jnp.zeros((obs_p_dim, hid_p), jnp.bfloat16)
    w1 = w1.at[:obs_dim, :hidden].set(params["w1"].astype(jnp.bfloat16))
    b1 = jnp.zeros((1, hid_p), jnp.float32)
    b1 = b1.at[:, :hidden].set(params["b1"].reshape(1, -1))

    wh = jnp.zeros((hid_p, tot), jnp.bfloat16)
    bh = jnp.full((1, tot), NEG_INF, jnp.float32)
    for h, (_, _, size, _) in enumerate(head_meta):
        w, b = params["heads"][h]
        wh = wh.at[:hidden, offsets[h]:offsets[h] + size].set(
            w.astype(jnp.bfloat16))
        bh = bh.at[:, offsets[h]:offsets[h] + size].set(b.reshape(1, -1))

    # ---- per-sample side data hoisted out of the kernel (trivial XLA ops) --
    act = act.astype(jnp.int32)
    mask_rows = action_mask[act[:, 0]].astype(jnp.float32)      # (B, n_comp)
    idx_cols, msk_cols = [], []
    for h, (comp, kind, size, xy) in enumerate(head_meta):
        a = act[:, comp]
        if kind == "div":
            a = a // xy
        elif kind == "mod":
            a = a % xy
        idx_cols.append(a + offsets[h])          # lane index in packed layout
        msk_cols.append(mask_rows[:, comp])
    head_idx = jnp.stack(idx_cols, axis=1)                      # (B, n_heads)
    head_msk = jnp.stack(msk_cols, axis=1)                      # (B, n_heads)

    # zero-pad everything tiled over the batch grid
    obs_p = jnp.zeros((b_pad, obs_p_dim), jnp.bfloat16)
    obs_p = obs_p.at[:B, :obs_dim].set(obs.astype(jnp.bfloat16))
    idx_p = jnp.zeros((b_pad, 128), jnp.int32).at[:B, :n_heads].set(head_idx)
    msk_p = jnp.zeros((b_pad, 128), jnp.float32).at[:B, :n_heads].set(head_msk)

    grid = (b_pad // tile_b,)
    kernel = _make_kernel(tuple(offsets), tuple(sizes), tot, slab_w)

    slab = pl.pallas_call(
        kernel,
        out_shape=jax.ShapeDtypeStruct((b_pad, slab_w), jnp.float32),
        grid=grid,
        in_specs=[
            pl.BlockSpec((tile_b, obs_p_dim), lambda i: (i, 0)),   # obs (tiled)
            pl.BlockSpec((obs_p_dim, hid_p), lambda i: (0, 0)),    # W1 (resident)
            pl.BlockSpec((1, hid_p), lambda i: (0, 0)),            # b1
            pl.BlockSpec((hid_p, tot), lambda i: (0, 0)),          # fused Wh
            pl.BlockSpec((1, tot), lambda i: (0, 0)),              # fused bh
            pl.BlockSpec((tile_b, 128), lambda i: (i, 0)),         # lane indices
            pl.BlockSpec((tile_b, 128), lambda i: (i, 0)),         # head masks
        ],
        out_specs=pl.BlockSpec((tile_b, slab_w), lambda i: (i, 0)),
        compiler_params=pltpu.CompilerParams(
            dimension_semantics=("parallel",),
            vmem_limit_bytes=32 * 1024 * 1024),
    )(obs_p, w1, b1, wh, bh, idx_p, msk_p)

    head_logits = [slab[:B, offsets[h]:offsets[h] + sizes[h]]
                   for h in range(n_heads)]
    logp_a = slab[:B, tot]

    # re-group heads into the per-component structure (tuple for SPATIAL)
    pis = []
    h = 0
    for (atype, n) in action_spec:
        if atype == SPATIAL:
            pis.append((head_logits[h], head_logits[h + 1]))
            h += 2
        else:
            pis.append(head_logits[h])
            h += 1
    return pis, logp_a


# --------------------------- pure-JAX reference ------------------------------
def reference_forward(obs, act, params, action_spec, action_mask):
    feat = jnp.maximum(obs @ params["w1"] + params["b1"], 0.0)
    head_meta = build_head_meta(action_spec)
    comp_logp = [jnp.zeros((obs.shape[0],), jnp.float32)
                 for _ in range(len(action_spec))]
    logits_list = []
    for h, (comp, kind, size, xy) in enumerate(head_meta):
        w, b = params["heads"][h]
        logits = feat @ w + b
        logits_list.append(logits)
        logprob = jax.nn.log_softmax(logits, axis=-1)
        a = act[:, comp]
        if kind == "div":
            a = a // xy
        elif kind == "mod":
            a = a % xy
        comp_logp[comp] = comp_logp[comp] + jnp.take_along_axis(
            logprob, a[:, None], axis=1)[:, 0]
    mask_b = action_mask[act[:, 0]].astype(jnp.float32)
    logp = jnp.sum(jnp.stack(comp_logp, axis=1) * mask_b, axis=1)
    return logp, logits_list


# --------------------------------- main --------------------------------------
if __name__ == "__main__":
    key = jax.random.PRNGKey(0)

    B = 2
    OBS_DIM = 32
    HIDDEN = 32
    action_spec = [(ACTION_TYPE, 8), (SCALAR, 6), (SPATIAL, 256)]
    N_TYPES = action_spec[0][1]
    N_COMP = len(action_spec)

    def linear_init(k, fan_in, fan_out):
        kw, kb = jax.random.split(k)
        bound = 1.0 / math.sqrt(fan_in)
        w = jax.random.uniform(kw, (fan_in, fan_out), jnp.float32, -bound, bound)
        b = jax.random.uniform(kb, (1, fan_out), jnp.float32, -bound, bound)
        return w, b

    keys = jax.random.split(key, 16)
    w1, b1 = linear_init(keys[0], OBS_DIM, HIDDEN)
    head_meta = build_head_meta(action_spec)
    heads = []
    for h, (_, _, size, _) in enumerate(head_meta):
        wh_, bh_ = linear_init(keys[1 + h], HIDDEN, size)
        heads.append((wh_, bh_))
    params = {"w1": w1, "b1": b1, "heads": heads}

    # deterministic action mask table: (n_action_types, n_components)
    action_mask = (jax.random.uniform(keys[10], (N_TYPES, N_COMP)) > 0.3
                   ).astype(jnp.int32)

    obs = jax.random.normal(keys[11], (B, OBS_DIM), jnp.float32)
    act = jnp.stack(
        [jax.random.randint(keys[12], (B,), 0, 8),
         jax.random.randint(keys[13], (B,), 0, 6),
         jax.random.randint(keys[14], (B,), 0, 256)],
        axis=1).astype(jnp.int32)

    pis, logp_a = sc2_actor_forward(obs, act, params, action_spec, action_mask)
    jax.block_until_ready(logp_a)

    # correctness check against a pure-JAX f32 reference
    # (tolerance relaxed for the bf16 MXU matmuls)
    logp_ref, logits_ref = reference_forward(obs, act, params, action_spec,
                                             action_mask)
    assert jnp.allclose(logp_a, logp_ref, atol=2e-2, rtol=2e-2), (logp_a, logp_ref)
    flat_pis = []
    for p in pis:
        if isinstance(p, tuple):
            flat_pis += list(p)
        else:
            flat_pis.append(p)
    for got, want in zip(flat_pis, logits_ref):
        assert jnp.allclose(got, want, atol=2e-2, rtol=2e-2), (got, want)

    print("KERNEL_OK")
</pallas_src>

<mosaic_0001>
module attributes {stable_mosaic.version = 11 : i64} {
  func.func @kernel(%arg0: i32, %arg1: memref<8x128xbf16, #tpu.memory_space<vmem>>, %arg2: memref<128x128xbf16, #tpu.memory_space<vmem>>, %arg3: memref<1x128xf32, #tpu.memory_space<vmem>>, %arg4: memref<128x128xbf16, #tpu.memory_space<vmem>>, %arg5: memref<1x128xf32, #tpu.memory_space<vmem>>, %arg6: memref<8x128xi32, #tpu.memory_space<vmem>>, %arg7: memref<8x128xf32, #tpu.memory_space<vmem>>, %arg8: memref<8x256xf32, #tpu.memory_space<vmem>>) attributes {dimension_semantics = [#tpu.dimension_semantics<parallel>], iteration_bounds = array<i64: 1>, scalar_prefetch = 0 : i64, scratch_operands = 0 : i64, tpu.core_type = #tpu.core_type<tc>, window_params = [{transform_indices = @transform_0, window_bounds = array<i64: 8, 128>}, {pipeline_mode = #tpu.pipeline_mode<synchronous>, transform_indices = @transform_1, window_bounds = array<i64: 128, 128>}, {pipeline_mode = #tpu.pipeline_mode<synchronous>, transform_indices = @transform_2, window_bounds = array<i64: 1, 128>}, {pipeline_mode = #tpu.pipeline_mode<synchronous>, transform_indices = @transform_3, window_bounds = array<i64: 128, 128>}, {pipeline_mode = #tpu.pipeline_mode<synchronous>, transform_indices = @transform_4, window_bounds = array<i64: 1, 128>}, {transform_indices = @transform_5, window_bounds = array<i64: 8, 128>}, {transform_indices = @transform_6, window_bounds = array<i64: 8, 128>}, {transform_indices = @transform_7, window_bounds = array<i64: 8, 256>}]} {
    %c0 = arith.constant 0 : index
    %c0_0 = arith.constant 0 : index
    %0 = vector.load %arg1[%c0, %c0_0] : memref<8x128xbf16, #tpu.memory_space<vmem>>, vector<8x128xbf16>
    %c0_1 = arith.constant 0 : index
    %c0_2 = arith.constant 0 : index
    %1 = vector.load %arg2[%c0_1, %c0_2] : memref<128x128xbf16, #tpu.memory_space<vmem>>, vector<128x128xbf16>
    %cst = arith.constant dense<0.000000e+00> : vector<8x128xf32>
    %2 = tpu.matmul %0, %1, %cst {dimension_numbers = #tpu.dot_dimension_numbers<[1], [0], [0], [1], [0, 0, 1, 1], [], []>} : vector<8x128xbf16>, vector<128x128xbf16>, vector<8x128xf32> -> vector<8x128xf32>
    %c0_3 = arith.constant 0 : index
    %c0_4 = arith.constant 0 : index
    %3 = vector.load %arg3[%c0_3, %c0_4] : memref<1x128xf32, #tpu.memory_space<vmem>>, vector<1x128xf32>
    %4 = vector.broadcast %3 : vector<1x128xf32> to vector<8x128xf32>
    %5 = arith.addf %2, %4 : vector<8x128xf32>
    %cst_5 = arith.constant 0.000000e+00 : f32
    %6 = vector.broadcast %cst_5 : f32 to vector<8x128xf32>
    %7 = arith.maximumf %5, %6 : vector<8x128xf32>
    %8 = arith.truncf %7 : vector<8x128xf32> to vector<8x128xbf16>
    %c0_6 = arith.constant 0 : index
    %c0_7 = arith.constant 0 : index
    %9 = vector.load %arg4[%c0_6, %c0_7] : memref<128x128xbf16, #tpu.memory_space<vmem>>, vector<128x128xbf16>
    %cst_8 = arith.constant dense<0.000000e+00> : vector<8x128xf32>
    %10 = tpu.matmul %8, %9, %cst_8 {dimension_numbers = #tpu.dot_dimension_numbers<[1], [0], [0], [1], [0, 0, 1, 1], [], []>} : vector<8x128xbf16>, vector<128x128xbf16>, vector<8x128xf32> -> vector<8x128xf32>
    %c0_9 = arith.constant 0 : index
    %c0_10 = arith.constant 0 : index
    %11 = vector.load %arg5[%c0_9, %c0_10] : memref<1x128xf32, #tpu.memory_space<vmem>>, vector<1x128xf32>
    %12 = vector.broadcast %11 : vector<1x128xf32> to vector<8x128xf32>
    %13 = arith.addf %10, %12 : vector<8x128xf32>
    %c0_11 = arith.constant 0 : index
    %c0_12 = arith.constant 0 : index
    %14 = vector.load %arg8[%c0_11, %c0_12] : memref<8x256xf32, #tpu.memory_space<vmem>>, vector<8x128xf32>
    tpu.vector_store %arg8[%c0_11, %c0_12], %13 {strides = array<i32>} : memref<8x256xf32, #tpu.memory_space<vmem>>, vector<8x128xf32>,
    %c0_13 = arith.constant 0 : index
    %c0_14 = arith.constant 0 : index
    %15 = vector.load %arg8[%c0_13, %c0_14] : memref<8x256xf32, #tpu.memory_space<vmem>>, vector<8x128xf32>
    %16 = tpu.iota {dimensions = array<i32: 1>} : vector<8x128xi32>
    %cst_15 = arith.constant -1.000000e+30 : f32
    %17 = vector.broadcast %cst_15 : f32 to vector<8x128xf32>
    %c0_i32 = arith.constant 0 : i32
    %18 = vector.broadcast %c0_i32 : i32 to vector<8x128xi32>
    %19 = arith.cmpi sge, %16, %18 : vector<8x128xi32>
    %c8_i32 = arith.constant 8 : i32
    %20 = vector.broadcast %c8_i32 : i32 to vector<8x128xi32>
    %21 = arith.cmpi slt, %16, %20 : vector<8x128xi32>
    %22 = arith.andi %19, %21 : vector<8x128xi1>
    %cst_16 = arith.constant -1.000000e+30 : f32
    %23 = vector.broadcast %cst_16 : f32 to vector<8x128xf32>
    %24 = arith.select %22, %15, %23 : vector<8x128xi1>, vector<8x128xf32>
    %cst_17 = arith.constant dense<0xFF800000> : vector<8xf32>
    %25 = vector.multi_reduction <maximumf>, %24, %cst_17 [1] : vector<8x128xf32> to vector<8xf32>
    %26 = vector.shape_cast %25 : vector<8xf32> to vector<8x1xf32>
    %27 = vector.shape_cast %26 : vector<8x1xf32> to vector<8x1xf32>
    %28 = vector.broadcast %27 : vector<8x1xf32> to vector<8x128xf32>
    %29 = arith.select %22, %28, %17 : vector<8x128xi1>, vector<8x128xf32>
    %c8_i32_18 = arith.constant 8 : i32
    %30 = vector.broadcast %c8_i32_18 : i32 to vector<8x128xi32>
    %31 = arith.cmpi sge, %16, %30 : vector<8x128xi32>
    %c14_i32 = arith.constant 14 : i32
    %32 = vector.broadcast %c14_i32 : i32 to vector<8x128xi32>
    %33 = arith.cmpi slt, %16, %32 : vector<8x128xi32>
    %34 = arith.andi %31, %33 : vector<8x128xi1>
    %cst_19 = arith.constant -1.000000e+30 : f32
    %35 = vector.broadcast %cst_19 : f32 to vector<8x128xf32>
    %36 = arith.select %34, %15, %35 : vector<8x128xi1>, vector<8x128xf32>
    %cst_20 = arith.constant dense<0xFF800000> : vector<8xf32>
    %37 = vector.multi_reduction <maximumf>, %36, %cst_20 [1] : vector<8x128xf32> to vector<8xf32>
    %38 = vector.shape_cast %37 : vector<8xf32> to vector<8x1xf32>
    %39 = vector.shape_cast %38 : vector<8x1xf32> to vector<8x1xf32>
    %40 = vector.broadcast %39 : vector<8x1xf32> to vector<8x128xf32>
    %41 = arith.select %34, %40, %29 : vector<8x128xi1>, vector<8x128xf32>
    %c14_i32_21 = arith.constant 14 : i32
    %42 = vector.broadcast %c14_i32_21 : i32 to vector<8x128xi32>
    %43 = arith.cmpi sge, %16, %42 : vector<8x128xi32>
    %c30_i32 = arith.constant 30 : i32
    %44 = vector.broadcast %c30_i32 : i32 to vector<8x128xi32>
    %45 = arith.cmpi slt, %16, %44 : vector<8x128xi32>
    %46 = arith.andi %43, %45 : vector<8x128xi1>
    %cst_22 = arith.constant -1.000000e+30 : f32
    %47 = vector.broadcast %cst_22 : f32 to vector<8x128xf32>
    %48 = arith.select %46, %15, %47 : vector<8x128xi1>, vector<8x128xf32>
    %cst_23 = arith.constant dense<0xFF800000> : vector<8xf32>
    %49 = vector.multi_reduction <maximumf>, %48, %cst_23 [1] : vector<8x128xf32> to vector<8xf32>
    %50 = vector.shape_cast %49 : vector<8xf32> to vector<8x1xf32>
    %51 = vector.shape_cast %50 : vector<8x1xf32> to vector<8x1xf32>
    %52 = vector.broadcast %51 : vector<8x1xf32> to vector<8x128xf32>
    %53 = arith.select %46, %52, %41 : vector<8x128xi1>, vector<8x128xf32>
    %c30_i32_24 = arith.constant 30 : i32
    %54 = vector.broadcast %c30_i32_24 : i32 to vector<8x128xi32>
    %55 = arith.cmpi sge, %16, %54 : vector<8x128xi32>
    %c46_i32 = arith.constant 46 : i32
    %56 = vector.broadcast %c46_i32 : i32 to vector<8x128xi32>
    %57 = arith.cmpi slt, %16, %56 : vector<8x128xi32>
    %58 = arith.andi %55, %57 : vector<8x128xi1>
    %cst_25 = arith.constant -1.000000e+30 : f32
    %59 = vector.broadcast %cst_25 : f32 to vector<8x128xf32>
    %60 = arith.select %58, %15, %59 : vector<8x128xi1>, vector<8x128xf32>
    %cst_26 = arith.constant dense<0xFF800000> : vector<8xf32>
    %61 = vector.multi_reduction <maximumf>, %60, %cst_26 [1] : vector<8x128xf32> to vector<8xf32>
    %62 = vector.shape_cast %61 : vector<8xf32> to vector<8x1xf32>
    %63 = vector.shape_cast %62 : vector<8x1xf32> to vector<8x1xf32>
    %64 = vector.broadcast %63 : vector<8x1xf32> to vector<8x128xf32>
    %65 = arith.select %58, %64, %53 : vector<8x128xi1>, vector<8x128xf32>
    %66 = arith.subf %15, %65 : vector<8x128xf32>
    %67 = math.exp %66 : vector<8x128xf32>
    %c0_27 = arith.constant 0 : index
    %c0_28 = arith.constant 0 : index
    %68 = vector.load %arg6[%c0_27, %c0_28] : memref<8x128xi32, #tpu.memory_space<vmem>>, vector<8x128xi32>
    %c0_29 = arith.constant 0 : index
    %c0_30 = arith.constant 0 : index
    %69 = vector.load %arg7[%c0_29, %c0_30] : memref<8x128xf32, #tpu.memory_space<vmem>>, vector<8x128xf32>
    %cst_31 = arith.constant 0.000000e+00 : f32
    %70 = vector.broadcast %cst_31 : f32 to vector<8x1xf32>
    %c0_i32_32 = arith.constant 0 : i32
    %71 = vector.broadcast %c0_i32_32 : i32 to vector<8x128xi32>
    %72 = arith.cmpi sge, %16, %71 : vector<8x128xi32>
    %c8_i32_33 = arith.constant 8 : i32
    %73 = vector.broadcast %c8_i32_33 : i32 to vector<8x128xi32>
    %74 = arith.cmpi slt, %16, %73 : vector<8x128xi32>
    %75 = arith.andi %72, %74 : vector<8x128xi1>
    %cst_34 = arith.constant 0.000000e+00 : f32
    %76 = vector.broadcast %cst_34 : f32 to vector<8x128xf32>
    %77 = arith.select %75, %67, %76 : vector<8x128xi1>, vector<8x128xf32>
    %cst_35 = arith.constant dense<0.000000e+00> : vector<8xf32>
    %78 = vector.multi_reduction <add>, %77, %cst_35 [1] : vector<8x128xf32> to vector<8xf32>
    %79 = vector.shape_cast %78 : vector<8xf32> to vector<8x1xf32>
    %80 = math.log %79 : vector<8x1xf32>
    %81 = arith.addf %80, %26 : vector<8x1xf32>
    %82 = vector.extract_strided_slice %68 {offsets = [0, 0], sizes = [8, 1], strides = [1, 1]} : vector<8x128xi32> to vector<8x1xi32>
    %83 = vector.broadcast %82 : vector<8x1xi32> to vector<8x128xi32>
    %84 = arith.cmpi eq, %16, %83 : vector<8x128xi32>
    %cst_36 = arith.constant 0.000000e+00 : f32
    %85 = vector.broadcast %cst_36 : f32 to vector<8x128xf32>
    %86 = arith.select %84, %15, %85 : vector<8x128xi1>, vector<8x128xf32>
    %cst_37 = arith.constant dense<0.000000e+00> : vector<8xf32>
    %87 = vector.multi_reduction <add>, %86, %cst_37 [1] : vector<8x128xf32> to vector<8xf32>
    %88 = vector.shape_cast %87 : vector<8xf32> to vector<8x1xf32>
    %89 = arith.subf %88, %81 : vector<8x1xf32>
    %90 = vector.extract_strided_slice %69 {offsets = [0, 0], sizes = [8, 1], strides = [1, 1]} : vector<8x128xf32> to vector<8x1xf32>
    %91 = arith.mulf %89, %90 : vector<8x1xf32>
    %92 = arith.addf %70, %91 : vector<8x1xf32>
    %c8_i32_38 = arith.constant 8 : i32
    %93 = vector.broadcast %c8_i32_38 : i32 to vector<8x128xi32>
    %94 = arith.cmpi sge, %16, %93 : vector<8x128xi32>
    %c14_i32_39 = arith.constant 14 : i32
    %95 = vector.broadcast %c14_i32_39 : i32 to vector<8x128xi32>
    %96 = arith.cmpi slt, %16, %95 : vector<8x128xi32>
    %97 = arith.andi %94, %96 : vector<8x128xi1>
    %cst_40 = arith.constant 0.000000e+00 : f32
    %98 = vector.broadcast %cst_40 : f32 to vector<8x128xf32>
    %99 = arith.select %97, %67, %98 : vector<8x128xi1>, vector<8x128xf32>
    %cst_41 = arith.constant dense<0.000000e+00> : vector<8xf32>
    %100 = vector.multi_reduction <add>, %99, %cst_41 [1] : vector<8x128xf32> to vector<8xf32>
    %101 = vector.shape_cast %100 : vector<8xf32> to vector<8x1xf32>
    %102 = math.log %101 : vector<8x1xf32>
    %103 = arith.addf %102, %38 : vector<8x1xf32>
    %104 = vector.extract_strided_slice %68 {offsets = [0, 1], sizes = [8, 1], strides = [1, 1]} : vector<8x128xi32> to vector<8x1xi32>
    %105 = vector.broadcast %104 : vector<8x1xi32> to vector<8x128xi32>
    %106 = arith.cmpi eq, %16, %105 : vector<8x128xi32>
    %cst_42 = arith.constant 0.000000e+00 : f32
    %107 = vector.broadcast %cst_42 : f32 to vector<8x128xf32>
    %108 = arith.select %106, %15, %107 : vector<8x128xi1>, vector<8x128xf32>
    %cst_43 = arith.constant dense<0.000000e+00> : vector<8xf32>
    %109 = vector.multi_reduction <add>, %108, %cst_43 [1] : vector<8x128xf32> to vector<8xf32>
    %110 = vector.shape_cast %109 : vector<8xf32> to vector<8x1xf32>
    %111 = arith.subf %110, %103 : vector<8x1xf32>
    %112 = vector.extract_strided_slice %69 {offsets = [0, 1], sizes = [8, 1], strides = [1, 1]} : vector<8x128xf32> to vector<8x1xf32>
    %113 = arith.mulf %111, %112 : vector<8x1xf32>
    %114 = arith.addf %92, %113 : vector<8x1xf32>
    %c14_i32_44 = arith.constant 14 : i32
    %115 = vector.broadcast %c14_i32_44 : i32 to vector<8x128xi32>
    %116 = arith.cmpi sge, %16, %115 : vector<8x128xi32>
    %c30_i32_45 = arith.constant 30 : i32
    %117 = vector.broadcast %c30_i32_45 : i32 to vector<8x128xi32>
    %118 = arith.cmpi slt, %16, %117 : vector<8x128xi32>
    %119 = arith.andi %116, %118 : vector<8x128xi1>
    %cst_46 = arith.constant 0.000000e+00 : f32
    %120 = vector.broadcast %cst_46 : f32 to vector<8x128xf32>
    %121 = arith.select %119, %67, %120 : vector<8x128xi1>, vector<8x128xf32>
    %cst_47 = arith.constant dense<0.000000e+00> : vector<8xf32>
    %122 = vector.multi_reduction <add>, %121, %cst_47 [1] : vector<8x128xf32> to vector<8xf32>
    %123 = vector.shape_cast %122 : vector<8xf32> to vector<8x1xf32>
    %124 = math.log %123 : vector<8x1xf32>
    %125 = arith.addf %124, %50 : vector<8x1xf32>
    %126 = vector.extract_strided_slice %68 {offsets = [0, 2], sizes = [8, 1], strides = [1, 1]} : vector<8x128xi32> to vector<8x1xi32>
    %127 = vector.broadcast %126 : vector<8x1xi32> to vector<8x128xi32>
    %128 = arith.cmpi eq, %16, %127 : vector<8x128xi32>
    %cst_48 = arith.constant 0.000000e+00 : f32
    %129 = vector.broadcast %cst_48 : f32 to vector<8x128xf32>
    %130 = arith.select %128, %15, %129 : vector<8x128xi1>, vector<8x128xf32>
    %cst_49 = arith.constant dense<0.000000e+00> : vector<8xf32>
    %131 = vector.multi_reduction <add>, %130, %cst_49 [1] : vector<8x128xf32> to vector<8xf32>
    %132 = vector.shape_cast %131 : vector<8xf32> to vector<8x1xf32>
    %133 = arith.subf %132, %125 : vector<8x1xf32>
    %134 = vector.extract_strided_slice %69 {offsets = [0, 2], sizes = [8, 1], strides = [1, 1]} : vector<8x128xf32> to vector<8x1xf32>
    %135 = arith.mulf %133, %134 : vector<8x1xf32>
    %136 = arith.addf %114, %135 : vector<8x1xf32>
    %c30_i32_50 = arith.constant 30 : i32
    %137 = vector.broadcast %c30_i32_50 : i32 to vector<8x128xi32>
    %138 = arith.cmpi sge, %16, %137 : vector<8x128xi32>
    %c46_i32_51 = arith.constant 46 : i32
    %139 = vector.broadcast %c46_i32_51 : i32 to vector<8x128xi32>
    %140 = arith.cmpi slt, %16, %139 : vector<8x128xi32>
    %141 = arith.andi %138, %140 : vector<8x128xi1>
    %cst_52 = arith.constant 0.000000e+00 : f32
    %142 = vector.broadcast %cst_52 : f32 to vector<8x128xf32>
    %143 = arith.select %141, %67, %142 : vector<8x128xi1>, vector<8x128xf32>
    %cst_53 = arith.constant dense<0.000000e+00> : vector<8xf32>
    %144 = vector.multi_reduction <add>, %143, %cst_53 [1] : vector<8x128xf32> to vector<8xf32>
    %145 = vector.shape_cast %144 : vector<8xf32> to vector<8x1xf32>
    %146 = math.log %145 : vector<8x1xf32>
    %147 = arith.addf %146, %62 : vector<8x1xf32>
    %148 = vector.extract_strided_slice %68 {offsets = [0, 3], sizes = [8, 1], strides = [1, 1]} : vector<8x128xi32> to vector<8x1xi32>
    %149 = vector.broadcast %148 : vector<8x1xi32> to vector<8x128xi32>
    %150 = arith.cmpi eq, %16, %149 : vector<8x128xi32>
    %cst_54 = arith.constant 0.000000e+00 : f32
    %151 = vector.broadcast %cst_54 : f32 to vector<8x128xf32>
    %152 = arith.select %150, %15, %151 : vector<8x128xi1>, vector<8x128xf32>
    %cst_55 = arith.constant dense<0.000000e+00> : vector<8xf32>
    %153 = vector.multi_reduction <add>, %152, %cst_55 [1] : vector<8x128xf32> to vector<8xf32>
    %154 = vector.shape_cast %153 : vector<8xf32> to vector<8x1xf32>
    %155 = arith.subf %154, %147 : vector<8x1xf32>
    %156 = vector.extract_strided_slice %69 {offsets = [0, 3], sizes = [8, 1], strides = [1, 1]} : vector<8x128xf32> to vector<8x1xf32>
    %157 = arith.mulf %155, %156 : vector<8x1xf32>
    %158 = arith.addf %136, %157 : vector<8x1xf32>
    %159 = vector.shape_cast %158 : vector<8x1xf32> to vector<8x1xf32>
    %160 = vector.broadcast %159 : vector<8x1xf32> to vector<8x128xf32>
    %c0_56 = arith.constant 0 : index
    %c128 = arith.constant 128 : index
    %161 = vector.load %arg8[%c0_56, %c128] : memref<8x256xf32, #tpu.memory_space<vmem>>, vector<8x128xf32>
    tpu.vector_store %arg8[%c0_56, %c128], %160 {strides = array<i32>} : memref<8x256xf32, #tpu.memory_space<vmem>>, vector<8x128xf32>,
    return
  }
  func.func @transform_0(%arg0: i32) -> (i32, i32) {
    %c0_i32 = arith.constant 0 : i32
    %c0_i32_0 = arith.constant 0 : i32
    return %arg0, %c0_i32 : i32, i32
  }
  func.func @transform_1(%arg0: i32) -> (i32, i32) {
    %c0_i32 = arith.constant 0 : i32
    %c0_i32_0 = arith.constant 0 : i32
    %c0_i32_1 = arith.constant 0 : i32
    return %c0_i32, %c0_i32_0 : i32, i32
  }
  func.func @transform_2(%arg0: i32) -> (i32, i32) {
    %c0_i32 = arith.constant 0 : i32
    %c0_i32_0 = arith.constant 0 : i32
    %c0_i32_1 = arith.constant 0 : i32
    return %c0_i32, %c0_i32_0 : i32, i32
  }
  func.func @transform_3(%arg0: i32) -> (i32, i32) {
    %c0_i32 = arith.constant 0 : i32
    %c0_i32_0 = arith.constant 0 : i32
    %c0_i32_1 = arith.constant 0 : i32
    return %c0_i32, %c0_i32_0 : i32, i32
  }
  func.func @transform_4(%arg0: i32) -> (i32, i32) {
    %c0_i32 = arith.constant 0 : i32
    %c0_i32_0 = arith.constant 0 : i32
    %c0_i32_1 = arith.constant 0 : i32
    return %c0_i32, %c0_i32_0 : i32, i32
  }
  func.func @transform_5(%arg0: i32) -> (i32, i32) {
    %c0_i32 = arith.constant 0 : i32
    %c0_i32_0 = arith.constant 0 : i32
    return %arg0, %c0_i32 : i32, i32
  }
  func.func @transform_6(%arg0: i32) -> (i32, i32) {
    %c0_i32 = arith.constant 0 : i32
    %c0_i32_0 = arith.constant 0 : i32
    return %arg0, %c0_i32 : i32, i32
  }
  func.func @transform_7(%arg0: i32) -> (i32, i32) {
    %c0_i32 = arith.constant 0 : i32
    %c0_i32_0 = arith.constant 0 : i32
    return %arg0, %c0_i32 : i32, i32
  }
}

</mosaic_0001>

<llo_original>
// kernel: tpu_custom_call.1
$region0: #{tpu_custom_call.1}
  #allocation0 [shape = 'u32[]', space=smem, size = 0x4, offset = 0x4, fixed_abs, tag = 'smem constant byte address 0x4 - core index']
  #allocation1 [shape = 'u32[72,128]{1,0:T(1,128)}', space=vmem, size = 0x9000, scoped, tag = 'internal scratch']
  %s0 = inlined_call_operand.hbm [shape: bf16[8,128], index: 0, kind: input, shape index: {}]
  %s1 = inlined_call_operand.hbm [shape: bf16[128,128], index: 1, kind: input, shape index: {}]
  %s2 = inlined_call_operand.vmem [shape: f32[1,128], index: 2, kind: input, shape index: {}]
  %s3 = inlined_call_operand.hbm [shape: bf16[128,128], index: 3, kind: input, shape index: {}]
  %s4 = inlined_call_operand.vmem [shape: f32[1,128], index: 4, kind: input, shape index: {}]
  %s5 = inlined_call_operand.hbm [shape: s32[8,128], index: 5, kind: input, shape index: {}]
  %s6 = inlined_call_operand.hbm [shape: f32[8,128], index: 6, kind: input, shape index: {}]
  %s7 = inlined_call_operand.hbm [shape: f32[8,256], index: 7, kind: output, shape index: {}]
  %s8 = sld [smem:[#allocation0]]
  $region58: #{tpu_custom_call.1} parent=0
    _
  %s10 = ssub.s32 1, %s8
  %s11 = scalar_select 0, %s10, %s8
  $region1: #{tpu_custom_call.1} parent=0
    #allocation2 [shape = 'u8[2048]{0}', space=vmem, size = 0x800, scoped, tag = 'input window, operand 0, single buffered']
    #allocation3 [shape = 's32[1]{0}', space=sflag, size = 0x4, scoped, tag = 'scoped memory for tpu_custom_call.1']
    #allocation4 [shape = 's32[1]{0}', space=sflag, size = 0x4, scoped, tag = 'scoped memory for tpu_custom_call.1']
    #allocation5 [shape = 'u8[32768]{0}', space=vmem, size = 0x8000, scoped, tag = 'input window, operand 1, single buffered']
    #allocation6 [shape = 's32[1]{0}', space=sflag, size = 0x4, scoped, tag = 'scoped memory for tpu_custom_call.1']
    #allocation7 [shape = 'u8[32768]{0}', space=vmem, size = 0x8000, scoped, tag = 'input window, operand 3, single buffered']
    #allocation8 [shape = 'u8[4096]{0}', space=vmem, size = 0x1000, scoped, tag = 'input window, operand 5, single buffered']
    #allocation9 [shape = 's32[1]{0}', space=sflag, size = 0x4, scoped, tag = 'scoped memory for tpu_custom_call.1']
    #allocation10 [shape = 'u8[4096]{0}', space=vmem, size = 0x1000, scoped, tag = 'input window, operand 6, single buffered']
    #allocation11 [shape = 'u8[8192]{0}', space=vmem, size = 0x2000, scoped, tag = 'output window, operand 0, single buffered']
    %12 = vsyncpa [#allocation3], 0
    %13 = vsyncpa [#allocation6], 0
    %14 = vsyncpa [#allocation9], 0
    %15 = vsyncpa [#allocation4], 0
    // Predicated region
    $region2: #{tpu_custom_call.1} parent=1 // pred_check
      _
    $region3: #{tpu_custom_call.1} parent=1 // pred_check_branch
      %17 = sbr.rel (0) target = $region5
    $region4: #{tpu_custom_call.1} parent=1 // pred_region
      %19 = vsyncadd [#allocation3], 0
      %s21 = sshll.u32 %s0, 4
      %s22 = int_to_ptr.hbm [resolvable:$true] %s21
      %s23 = sshll.u32 [#allocation2], 4
      %s24 = int_to_ptr.vmem [resolvable:$true] %s23
      %26 = dma.hbm_to_vmem [thread:$0]  %s22, 64, %s24, [#allocation3]
    $region5: #{tpu_custom_call.1} parent=1 // pred_fallthru
      _
    // Predicated region
    $region6: #{tpu_custom_call.1} parent=1 // pred_check
      _
    $region7: #{tpu_custom_call.1} parent=1 // pred_check_branch
      %28 = sbr.rel (0) target = $region9
    $region8: #{tpu_custom_call.1} parent=1 // pred_region
      %30 = vsyncadd [#allocation6], 0
      %s31 = sshll.u32 %s1, 4
      %s32 = int_to_ptr.hbm [resolvable:$true] %s31
      %s33 = sshll.u32 [#allocation5], 4
      %s34 = int_to_ptr.vmem [resolvable:$true] %s33
      %39 = dma.hbm_to_vmem [thread:$0]  %s32, 1024, %s34, [#allocation6], 64, 64, 4
    $region9: #{tpu_custom_call.1} parent=1 // pred_fallthru
      _
    // Predicated region
    $region10: #{tpu_custom_call.1} parent=1 // pred_check
      _
    $region11: #{tpu_custom_call.1} parent=1 // pred_check_branch
      %41 = sbr.rel (0) target = $region13
    $region12: #{tpu_custom_call.1} parent=1 // pred_region
      _
    $region13: #{tpu_custom_call.1} parent=1 // pred_fallthru
      _
    // Predicated region
    $region14: #{tpu_custom_call.1} parent=1 // pred_check
      _
    $region15: #{tpu_custom_call.1} parent=1 // pred_check_branch
      %43 = sbr.rel (0) target = $region17
    $region16: #{tpu_custom_call.1} parent=1 // pred_region
      %45 = vsyncadd [#allocation6], 0
      %s46 = sshll.u32 %s3, 4
      %s47 = int_to_ptr.hbm [resolvable:$true] %s46
      %s48 = sshll.u32 [#allocation7], 4
      %s49 = int_to_ptr.vmem [resolvable:$true] %s48
      %54 = dma.hbm_to_vmem [thread:$0]  %s47, 1024, %s49, [#allocation6], 64, 64, 4
    $region17: #{tpu_custom_call.1} parent=1 // pred_fallthru
      _
    // Predicated region
    $region18: #{tpu_custom_call.1} parent=1 // pred_check
      _
    $region19: #{tpu_custom_call.1} parent=1 // pred_check_branch
      %56 = sbr.rel (0) target = $region21
    $region20: #{tpu_custom_call.1} parent=1 // pred_region
      _
    $region21: #{tpu_custom_call.1} parent=1 // pred_fallthru
      _
    // Predicated region
    $region22: #{tpu_custom_call.1} parent=1 // pred_check
      _
    $region23: #{tpu_custom_call.1} parent=1 // pred_check_branch
      %58 = sbr.rel (0) target = $region25
    $region24: #{tpu_custom_call.1} parent=1 // pred_region
      %60 = vsyncadd [#allocation9], 0
      %s62 = sshll.u32 %s5, 4
      %s63 = int_to_ptr.hbm [resolvable:$true] %s62
      %s64 = sshll.u32 [#allocation8], 4
      %s65 = int_to_ptr.vmem [resolvable:$true] %s64
      %67 = dma.hbm_to_vmem [thread:$0]  %s63, 128, %s65, [#allocation9]
    $region25: #{tpu_custom_call.1} parent=1 // pred_fallthru
      _
    // Predicated region
    $region26: #{tpu_custom_call.1} parent=1 // pred_check
      _
    $region27: #{tpu_custom_call.1} parent=1 // pred_check_branch
      %69 = sbr.rel (0) target = $region29
    $region28: #{tpu_custom_call.1} parent=1 // pred_region
      %71 = vsyncadd [#allocation9], 0
      %s73 = sshll.u32 %s6, 4
      %s74 = int_to_ptr.hbm [resolvable:$true] %s73
      %s75 = sshll.u32 [#allocation10], 4
      %s76 = int_to_ptr.vmem [resolvable:$true] %s75
      %78 = dma.hbm_to_vmem [thread:$0]  %s74, 128, %s76, [#allocation9]
    $region29: #{tpu_custom_call.1} parent=1 // pred_fallthru
      _
    // Predicated region
    $region30: #{tpu_custom_call.1} parent=1 // pred_check
      _
    $region31: #{tpu_custom_call.1} parent=1 // pred_check_branch
      %80 = sbr.rel (0) target = $region33
    $region32: #{tpu_custom_call.1} parent=1 // pred_region
      %82 = dma.done [#allocation3], 64
    $region33: #{tpu_custom_call.1} parent=1 // pred_fallthru
      _
    // Predicated region
    $region34: #{tpu_custom_call.1} parent=1 // pred_check
      _
    $region35: #{tpu_custom_call.1} parent=1 // pred_check_branch
      %84 = sbr.rel (0) target = $region37
    $region36: #{tpu_custom_call.1} parent=1 // pred_region
      %86 = dma.done [#allocation6], 1024
    $region37: #{tpu_custom_call.1} parent=1 // pred_fallthru
      _
    // Predicated region
    $region38: #{tpu_custom_call.1} parent=1 // pred_check
      _
    $region39: #{tpu_custom_call.1} parent=1 // pred_check_branch
      %88 = sbr.rel (0) target = $region41
    $region40: #{tpu_custom_call.1} parent=1 // pred_region
      %90 = dma.done [#allocation6], 1024
    $region41: #{tpu_custom_call.1} parent=1 // pred_fallthru
      _
    // Predicated region
    $region42: #{tpu_custom_call.1} parent=1 // pred_check
      _
    $region43: #{tpu_custom_call.1} parent=1 // pred_check_branch
      %92 = sbr.rel (0) target = $region45
    $region44: #{tpu_custom_call.1} parent=1 // pred_region
      %94 = dma.done [#allocation9], 128
    $region45: #{tpu_custom_call.1} parent=1 // pred_fallthru
      _
    // Predicated region
    $region46: #{tpu_custom_call.1} parent=1 // pred_check
      _
    $region47: #{tpu_custom_call.1} parent=1 // pred_check_branch
      %96 = sbr.rel (0) target = $region49
    $region48: #{tpu_custom_call.1} parent=1 // pred_region
      %98 = dma.done [#allocation9], 128
    $region49: #{tpu_custom_call.1} parent=1 // pred_fallthru
      _
    %v99 = vld [vmem:[#allocation2] sm:$0xf]
    %v100 = vld [vmem:[#allocation5] sm:$0xf]
    %v101 = vld [vmem:[#allocation5 + $0x4] sm:$0xf]
    %v102 = vld [vmem:[#allocation5 + $0x8] sm:$0xf]
    %v103 = vld [vmem:[#allocation5 + $0xc] sm:$0xf]
    %v104 = vld [vmem:[#allocation5 + $0x10] sm:$0xf]
    %v105 = vld [vmem:[#allocation5 + $0x14] sm:$0xf]
    %v106 = vld [vmem:[#allocation5 + $0x18] sm:$0xf]
    %v107 = vld [vmem:[#allocation5 + $0x1c] sm:$0xf]
    %v108 = vld [vmem:[#allocation5 + $0x20] sm:$0xf]
    %v109 = vld [vmem:[#allocation5 + $0x24] sm:$0xf]
    %v110 = vld [vmem:[#allocation5 + $0x28] sm:$0xf]
    %v111 = vld [vmem:[#allocation5 + $0x2c] sm:$0xf]
    %v112 = vld [vmem:[#allocation5 + $0x30] sm:$0xf]
    %v113 = vld [vmem:[#allocation5 + $0x34] sm:$0xf]
    %v114 = vld [vmem:[#allocation5 + $0x38] sm:$0xf]
    %v115 = vld [vmem:[#allocation5 + $0x3c] sm:$0xf]
    %v116 = vld [vmem:[%s2] sm:$0x1]
    %v118 = vperm.slane %v116, 0
    %v136 = vunpack.c.l.b16 %v100
    %v137 = vunpack.c.l.b16 %v101
    %v138 = vunpack.c.l.b16 %v102
    %v139 = vunpack.c.l.b16 %v103
    %v140 = vunpack.c.l.b16 %v104
    %v141 = vunpack.c.l.b16 %v105
    %v142 = vunpack.c.l.b16 %v106
    %v143 = vunpack.c.l.b16 %v107
    %v144 = vunpack.c.l.b16 %v108
    %v145 = vunpack.c.l.b16 %v109
    %v146 = vunpack.c.l.b16 %v110
    %v147 = vunpack.c.l.b16 %v111
    %v148 = vunpack.c.l.b16 %v112
    %v149 = vunpack.c.l.b16 %v113
    %v150 = vunpack.c.l.b16 %v114
    %v151 = vunpack.c.l.b16 %v115
    %v152 = vpack.c.b16 %v137, %v136
    %v153 = vpack.c.b16 %v139, %v138
    %v154 = vpack.c.b16 %v141, %v140
    %v155 = vpack.c.b16 %v143, %v142
    %v156 = vpack.c.b16 %v145, %v144
    %v157 = vpack.c.b16 %v147, %v146
    %v158 = vpack.c.b16 %v149, %v148
    %v159 = vpack.c.b16 %v151, %v150
    %168 = vmatpush.bf16.msra.mxu0 %v159
    %169 = vmatpush.bf16.msra.mxu0 %v158
    %170 = vmatpush.bf16.msra.mxu0 %v157
    %171 = vmatpush.bf16.msra.mxu0 %v156
    %172 = vmatpush.bf16.msra.mxu0 %v155
    %173 = vmatpush.bf16.msra.mxu0 %v154
    %174 = vmatpush.bf16.msra.mxu0 %v153
    %175 = vmatpush.bf16.msra.mxu0 %v152
    %176 = vmatmul.bf16.gmra.mxu0 %v99
    %v177 = vpop.f32.mrf.mxu0
    %v178 = vadd.f32 %v118, %v177
    %v179 = vpop.f32.mrf.mxu0
    %180 = vdwg.mxu0
    %v181 = vmax.f32 %v178, 0.0
    %v182 = vpack.c.bf16 %v181, %v181
    %v183 = vld [vmem:[#allocation7] sm:$0xf]
    %v184 = vld [vmem:[#allocation7 + $0x4] sm:$0xf]
    %v185 = vld [vmem:[#allocation7 + $0x8] sm:$0xf]
    %v186 = vld [vmem:[#allocation7 + $0xc] sm:$0xf]
    %v187 = vld [vmem:[#allocation7 + $0x10] sm:$0xf]
    %v188 = vld [vmem:[#allocation7 + $0x14] sm:$0xf]
    %v189 = vld [vmem:[#allocation7 + $0x18] sm:$0xf]
    %v190 = vld [vmem:[#allocation7 + $0x1c] sm:$0xf]
    %v191 = vld [vmem:[#allocation7 + $0x20] sm:$0xf]
    %v192 = vld [vmem:[#allocation7 + $0x24] sm:$0xf]
    %v193 = vld [vmem:[#allocation7 + $0x28] sm:$0xf]
    %v194 = vld [vmem:[#allocation7 + $0x2c] sm:$0xf]
    %v195 = vld [vmem:[#allocation7 + $0x30] sm:$0xf]
    %v196 = vld [vmem:[#allocation7 + $0x34] sm:$0xf]
    %v197 = vld [vmem:[#allocation7 + $0x38] sm:$0xf]
    %v198 = vld [vmem:[#allocation7 + $0x3c] sm:$0xf]
    %v199 = vld [vmem:[%s4] sm:$0x1]
    %v201 = vperm.slane %v199, 0
    %v219 = vunpack.c.l.b16 %v183
    %v220 = vunpack.c.l.b16 %v184
    %v221 = vunpack.c.l.b16 %v185
    %v222 = vunpack.c.l.b16 %v186
    %v223 = vunpack.c.l.b16 %v187
    %v224 = vunpack.c.l.b16 %v188
    %v225 = vunpack.c.l.b16 %v189
    %v226 = vunpack.c.l.b16 %v190
    %v227 = vunpack.c.l.b16 %v191
    %v228 = vunpack.c.l.b16 %v192
    %v229 = vunpack.c.l.b16 %v193
    %v230 = vunpack.c.l.b16 %v194
    %v231 = vunpack.c.l.b16 %v195
    %v232 = vunpack.c.l.b16 %v196
    %v233 = vunpack.c.l.b16 %v197
    %v234 = vunpack.c.l.b16 %v198
    %v235 = vpack.c.b16 %v220, %v219
    %v236 = vpack.c.b16 %v222, %v221
    %v237 = vpack.c.b16 %v224, %v223
    %v238 = vpack.c.b16 %v226, %v225
    %v239 = vpack.c.b16 %v228, %v227
    %v240 = vpack.c.b16 %v230, %v229
    %v241 = vpack.c.b16 %v232, %v231
    %v242 = vpack.c.b16 %v234, %v233
    %251 = vmatpush.bf16.msra.mxu0 %v242
    %252 = vmatpush.bf16.msra.mxu0 %v241
    %253 = vmatpush.bf16.msra.mxu0 %v240
    %254 = vmatpush.bf16.msra.mxu0 %v239
    %255 = vmatpush.bf16.msra.mxu0 %v238
    %256 = vmatpush.bf16.msra.mxu0 %v237
    %257 = vmatpush.bf16.msra.mxu0 %v236
    %258 = vmatpush.bf16.msra.mxu0 %v235
    %259 = vmatmul.bf16.gmra.mxu0 %v182
    %v260 = vpop.f32.mrf.mxu0
    %v261 = vadd.f32 %v201, %v260
    %v262 = vpop.f32.mrf.mxu0
    %263 = vdwg.mxu0
    %264 = vst [vmem:[#allocation11] sm:$0xff] %v261
    %v265 = vld [vmem:[#allocation11] sm:$0xff]
    %v266 = vlaneseq
    %v267 = vand.u32 %v266, 127
    %vm268 = vcmp.ge.s32.totalorder %v267, 0
    %vm269 = vcmp.lt.s32.totalorder %v267, 8
    %vm270 = vmand %vm268, %vm269
    %v271 = vsel %vm270, %v265, -1e+30
    %272 = vmax.xlane.f32.xlu0 %v271
    %v273 = vpop.xlane.xlu0 %272
    %v274 = vsel %vm270, %v273, -1e+30
    %vm275 = vcmp.ge.s32.totalorder %v267, 8
    %vm276 = vcmp.lt.s32.totalorder %v267, 14
    %vm277 = vmand %vm275, %vm276
    %v278 = vsel %vm277, %v265, -1e+30
    %279 = vmax.xlane.f32.xlu0 %v278
    %v280 = vpop.xlane.xlu0 %279
    %v281 = vsel %vm277, %v280, %v274
    %vm282 = vcmp.ge.s32.totalorder %v267, 14
    %vm283 = vcmp.lt.s32.totalorder %v267, 30
    %vm284 = vmand %vm282, %vm283
    %v285 = vsel %vm284, %v265, -1e+30
    %286 = vmax.xlane.f32.xlu0 %v285
    %v287 = vpop.xlane.xlu0 %286
    %v288 = vsel %vm284, %v287, %v281
    %vm289 = vcmp.ge.s32.totalorder %v267, 30
    %vm290 = vcmp.lt.s32.totalorder %v267, 46
    %vm291 = vmand %vm289, %vm290
    %v292 = vsel %vm291, %v265, -1e+30
    %293 = vmax.xlane.f32.xlu0 %v292
    %v294 = vpop.xlane.xlu0 %293
    %v295 = vsel %vm291, %v294, %v288
    %v296 = vsub.f32 %v265, %v295
    %v297 = vmul.f32 %v296, 1.442695
    %v298 = vpow.pop %v297
    %v299 = vld [vmem:[#allocation8] sm:$0xff]
    %v300 = vld [vmem:[#allocation10] sm:$0xff]
    %v301 = vsel %vm270, %v298, 0.0
    %302 = vadd.xlane.f32.xlu0 %v301
    %v303 = vpop.xlane.xlu0 %302
    %v304 = vlog2.pop %v303
    %v305 = vmul.f32 %v304, 0.6931472
    %v306 = vadd.f32 %v305, %v273
    %307 = vset.pattern.permute.xlu0 0
    %308 = vperm.xlu0 %307, %v299
    %v309 = vpop.permute.xlu0 %308
    %vm310 = vcmp.eq.s32.totalorder %v267, %v309
    %v311 = vsel %vm310, %v265, 0.0
    %312 = vadd.xlane.f32.xlu0 %v311
    %v313 = vpop.xlane.xlu0 %312
    %v314 = vsub.f32 %v313, %v306
    %v315 = vmul.f32 %v314, %v300
    %v316 = vadd.f32 %v315, 0.0
    %v317 = vsel %vm277, %v298, 0.0
    %318 = vadd.xlane.f32.xlu0 %v317
    %v319 = vpop.xlane.xlu0 %318
    %v320 = vlog2.pop %v319
    %v321 = vmul.f32 %v320, 0.6931472
    %v322 = vadd.f32 %v321, %v280
    %323 = vset.pattern.permute.xlu0 1
    %324 = vperm.xlu0 %323, %v299
    %v325 = vpop.permute.xlu0 %324
    %vm326 = vcmp.eq.s32.totalorder %v267, %v325
    %v327 = vsel %vm326, %v265, 0.0
    %328 = vadd.xlane.f32.xlu0 %v327
    %v329 = vpop.xlane.xlu0 %328
    %v330 = vsub.f32 %v329, %v322
    %v331 = vmul.f32 %v330, %v300
    %333 = vrot.lane.b32.xlu0 %v331, 127
    %v334 = vpop.permute.xlu0 %333
    %v336 = vadd.f32 %v316, %v334
    %v337 = vsel %vm284, %v298, 0.0
    %338 = vadd.xlane.f32.xlu0 %v337
    %v339 = vpop.xlane.xlu0 %338
    %v340 = vlog2.pop %v339
    %v341 = vmul.f32 %v340, 0.6931472
    %v342 = vadd.f32 %v341, %v287
    %343 = vset.pattern.permute.xlu0 2
    %344 = vperm.xlu0 %343, %v299
    %v345 = vpop.permute.xlu0 %344
    %vm346 = vcmp.eq.s32.totalorder %v267, %v345
    %v347 = vsel %vm346, %v265, 0.0
    %348 = vadd.xlane.f32.xlu0 %v347
    %v349 = vpop.xlane.xlu0 %348
    %v350 = vsub.f32 %v349, %v342
    %v351 = vmul.f32 %v350, %v300
    %353 = vrot.lane.b32.xlu0 %v351, 126
    %v354 = vpop.permute.xlu0 %353
    %v356 = vadd.f32 %v336, %v354
    %v357 = vsel %vm291, %v298, 0.0
    %358 = vadd.xlane.f32.xlu0 %v357
    %v359 = vpop.xlane.xlu0 %358
    %v360 = vlog2.pop %v359
    %v361 = vmul.f32 %v360, 0.6931472
    %v362 = vadd.f32 %v361, %v294
    %363 = vset.pattern.permute.xlu0 3
    %364 = vperm.xlu0 %363, %v299
    %v365 = vpop.permute.xlu0 %364
    %vm366 = vcmp.eq.s32.totalorder %v267, %v365
    %v367 = vsel %vm366, %v265, 0.0
    %368 = vadd.xlane.f32.xlu0 %v367
    %v369 = vpop.xlane.xlu0 %368
    %v370 = vsub.f32 %v369, %v362
    %v371 = vmul.f32 %v370, %v300
    %373 = vrot.lane.b32.xlu0 %v371, 125
    %v374 = vpop.permute.xlu0 %373
    %v376 = vadd.f32 %v356, %v374
    %378 = vset.pattern.permute.xlu0 0
    %379 = vperm.xlu0 %378, %v376
    %v380 = vpop.permute.xlu0 %379
    %382 = vst [vmem:[#allocation11 + $0x8] sm:$0xff] %v380
    // Predicated region
    $region50: #{tpu_custom_call.1} parent=1 // pred_check
      _
    $region51: #{tpu_custom_call.1} parent=1 // pred_check_branch
      %384 = sbr.rel (0) target = $region53
    $region52: #{tpu_custom_call.1} parent=1 // pred_region
      %386 = vsyncadd [#allocation4], 0
      %s388 = sshll.u32 [#allocation11], 4
      %s389 = int_to_ptr.vmem [resolvable:$true] %s388
      %s390 = sshll.u32 %s7, 4
      %s391 = int_to_ptr.hbm [resolvable:$true] %s390
      %393 = dma.vmem_to_hbm [thread:$0]  %s389, 256, %s391, [#allocation4]
    $region53: #{tpu_custom_call.1} parent=1 // pred_fallthru
      _
    // Predicated region
    $region54: #{tpu_custom_call.1} parent=1 // pred_check
      _
    $region55: #{tpu_custom_call.1} parent=1 // pred_check_branch
      %395 = sbr.rel (0) target = $region57
    $region56: #{tpu_custom_call.1} parent=1 // pred_region
      %397 = dma.done [#allocation4], 256
    $region57: #{tpu_custom_call.1} parent=1 // pred_fallthru
      _
    %398 = vsyncpa [#allocation3], 1
    %399 = vsyncpa [#allocation6], 1
    %400 = vsyncpa [#allocation9], 1
    %401 = vsyncpa [#allocation4], 1

</llo_original>
